<compile_context>
chip_gen: v6e
topology: v6e:2x2x1
jax: 0.10.0
libtpu: 0.0.40
codegen_flags: <defaults>
</compile_context>

<pallas_src>
import functools

import jax
import jax.numpy as jnp
from jax import lax
from jax.experimental import pallas as pl
from jax.experimental.pallas import tpu as pltpu


_TM_CANDIDATES = (1024, 512, 256, 128, 64, 32, 16, 8)


def _round_up(x, m):
    return ((x + m - 1) // m) * m


def _physical_vmem_bytes():
    try:
        return int(pltpu.get_tpu_info().vmem_capacity_bytes)
    except Exception:
        return 64 << 20      # conservative fallback = v7x per-core VMEM


def _plan(m, c_in, c_out, x_bytes, vmem_cap):
    """Pick the row tile, grid size and whether the y slab can stay resident in VMEM."""
    budget = int(vmem_cap * 0.70)
    # Resident (non per-row) VMEM: weight (double-buffered) + gamma/beta/scale/shift/
    # stats refs + compiler-internal slack.
    fixed = 2 * c_in * c_out * x_bytes + (1 << 20)
    # Per-row VMEM: x tile (2x buffered, input dtype), out tile (2x, f32) and the
    # in-kernel temporaries (ReLU'd x, y, y*y, affine temp) -- budgeted explicitly.
    per_row = (2 * c_in * x_bytes      # x tile, double buffered
               + 2 * c_out * 4         # out tile, double buffered (f32)
               + 2 * c_in * 4          # ReLU'd / converted x temporaries
               + 4 * c_out * 4)        # y, y*y, affine temporaries
    avail = max(budget - fixed, 1 << 20)
    tm_cap = max(avail // per_row, 8)

    m8 = _round_up(max(m, 1), 8)
    if m8 <= min(tm_cap, _TM_CANDIDATES[0]):
        tm = m8                                   # whole slab in one tile
    else:
        tm = 8
        for cand in _TM_CANDIDATES:
            if cand <= tm_cap:
                tm = cand
                break

    num_tiles = -(-m // tm)
    m_pad = num_tiles * tm
    cache_bytes = m_pad * c_out * 4               # resident y slab (f32)
    cache_y = (fixed + tm * per_row + cache_bytes) <= budget
    return tm, num_tiles, m_pad, cache_y


def _cost_estimate(flops, bytes_accessed):
    try:
        return pl.CostEstimate(flops=int(flops), transcendentals=0,
                               bytes_accessed=int(bytes_accessed))
    except Exception:
        return None


# -----------------------------------------------------------------------------
# Fused kernel.  Grid = (phase, row_tile); phase 0 = stats (+ optional y cache),
# phase 1 = finalize BN affine (at tile 0) and apply.
# -----------------------------------------------------------------------------
def _fused_kernel(x_ref, w_ref, gamma_ref, beta_ref, o_ref,
                  y_cache, sum_ref, sq_ref, scale_ref, shift_ref,
                  *, cache_y, count, eps):
    p = pl.program_id(0)          # phase
    i = pl.program_id(1)          # row-tile index

    def compute_y():
        x = jnp.maximum(x_ref[...], 0.0)                          # ReLU (input dtype)
        return jnp.dot(x, w_ref[...], preferred_element_type=jnp.float32)

    @pl.when(p == 0)
    def _stats_phase():
        @pl.when(i == 0)
        def _():
            sum_ref[...] = jnp.zeros_like(sum_ref)
            sq_ref[...] = jnp.zeros_like(sq_ref)
        y = compute_y()
        sum_ref[...] += jnp.sum(y, axis=0, keepdims=True)
        sq_ref[...] += jnp.sum(y * y, axis=0, keepdims=True)
        if cache_y:
            y_cache[i] = y

    @pl.when((p == 1) & (i == 0))
    def _finalize():
        mean = sum_ref[...] / count
        var = jnp.maximum(sq_ref[...] / count - mean * mean, 0.0)  # biased var, guarded
        inv = lax.rsqrt(var + eps)
        s = gamma_ref[...] * inv
        scale_ref[...] = s
        shift_ref[...] = beta_ref[...] - mean * s

    @pl.when(p == 1)
    def _apply_phase():
        if cache_y:
            y = y_cache[i]
        else:
            y = compute_y()                                        # recompute path
        o_ref[...] = (y * scale_ref[...] + shift_ref[...]).astype(o_ref.dtype)


@functools.partial(jax.jit, static_argnames=("eps", "use_bf16", "force_no_cache"))
def factorized_reduce(x, w1, w2, gamma, beta, eps=1e-5, use_bf16=False,
                      force_no_cache=False):
    """x: (N, C_in, H, W) f32.  w1, w2: (C_out//2, C_in, 1, 1).  gamma/beta: (C_out,)."""
    n, c_in, h, w = x.shape
    c_half = w1.shape[0]
    c_out = 2 * c_half

    # ---- single fused producer: stride-2 subsample (1x1 conv stride 2 == subsample),
    #      NCHW -> (M, C_in), optional bf16 cast, M pad --------------------------------
    x_sub = x[:, :, ::2, ::2]
    hp, wp = x_sub.shape[2], x_sub.shape[3]
    m = n * hp * wp
    x_dtype = jnp.bfloat16 if use_bf16 else jnp.float32
    x2d = jnp.transpose(x_sub, (0, 2, 3, 1)).reshape(m, c_in).astype(x_dtype)

    # combined weight: columns 0..C_half-1 from conv_1, rest from conv_2.
    w_cat = jnp.concatenate([w1, w2], axis=0).reshape(c_out, c_in).T.astype(x_dtype)
    gamma2d = gamma.astype(jnp.float32).reshape(1, c_out)
    beta2d = beta.astype(jnp.float32).reshape(1, c_out)

    # ---- tile / cache planning from this chip's physical VMEM -----------------------
    vmem_cap = _physical_vmem_bytes()
    x_bytes = 2 if use_bf16 else 4
    tm, num_tiles, m_pad, cache_y = _plan(m, c_in, c_out, x_bytes, vmem_cap)
    if force_no_cache:
        cache_y = False
    if m_pad != m:
        x2d = jnp.pad(x2d, ((0, m_pad - m), (0, 0)))   # zero rows: stats-safe

    if cache_y:
        x_map = lambda p, i: (i * (1 - p), 0)          # phase 1 never re-reads x2d
        y_cache_shape = (num_tiles, tm, c_out)
    else:
        x_map = lambda p, i: (i, 0)                    # phase 1 re-reads & recomputes
        y_cache_shape = (1, 8, 128)                    # unused dummy scratch

    flops = 2 * m_pad * c_in * c_out * (1 if cache_y else 2) + 6 * m_pad * c_out
    bytes_accessed = (m_pad * c_in * x_bytes * (1 if cache_y else 2)
                      + c_in * c_out * x_bytes
                      + m_pad * c_out * 4
                      + 4 * 4 * c_out)

    out2d = pl.pallas_call(
        functools.partial(_fused_kernel, cache_y=cache_y, count=float(m),
                          eps=float(eps)),
        out_shape=jax.ShapeDtypeStruct((m_pad, c_out), jnp.float32),
        grid_spec=pltpu.PrefetchScalarGridSpec(
            num_scalar_prefetch=0,
            grid=(2, num_tiles),
            in_specs=[
                pl.BlockSpec((tm, c_in), x_map),
                pl.BlockSpec((c_in, c_out), lambda p, i: (0, 0)),
                pl.BlockSpec((1, c_out), lambda p, i: (0, 0)),
                pl.BlockSpec((1, c_out), lambda p, i: (0, 0)),
            ],
            # phase 0: index stays 0 and the block is never written (no garbage
            # writeback); phase 1 walks the output tiles.
            out_specs=pl.BlockSpec((tm, c_out), lambda p, i: (i * p, 0)),
            scratch_shapes=[
                pltpu.VMEM(y_cache_shape, jnp.float32),   # resident y slab (or dummy)
                pltpu.VMEM((1, c_out), jnp.float32),      # per-channel sum
                pltpu.VMEM((1, c_out), jnp.float32),      # per-channel sum of squares
                pltpu.VMEM((1, c_out), jnp.float32),      # BN scale
                pltpu.VMEM((1, c_out), jnp.float32),      # BN shift
            ],
        ),
        compiler_params=pltpu.CompilerParams(
            dimension_semantics=("arbitrary", "arbitrary"),
            vmem_limit_bytes=int(vmem_cap * 0.75)),
        cost_estimate=_cost_estimate(flops, bytes_accessed),
    )(x2d, w_cat, gamma2d, beta2d)

    # TODO(synk): return NHWC (or let the consumer fuse this) to drop the final
    # HBM read+write of the output; kept NCHW to match the PyTorch module.
    out = out2d[:m].reshape(n, hp, wp, c_out).transpose(0, 3, 1, 2)
    return out


def _reference(x, w1, w2, gamma, beta, eps=1e-5):
    """Pure-JAX reference mirroring the PyTorch module (training-mode BN)."""
    xr = jnp.maximum(x, 0.0)
    xs = xr[:, :, ::2, ::2]                                  # stride-2, 1x1 kernel
    o1 = jnp.einsum("oc,nchw->nohw", w1.reshape(w1.shape[0], w1.shape[1]), xs)
    o2 = jnp.einsum("oc,nchw->nohw", w2.reshape(w2.shape[0], w2.shape[1]), xs)
    o = jnp.concatenate([o1, o2], axis=1)
    mean = o.mean(axis=(0, 2, 3), keepdims=True)
    var = o.var(axis=(0, 2, 3), keepdims=True)               # biased
    g = gamma.reshape(1, -1, 1, 1)
    b = beta.reshape(1, -1, 1, 1)
    return (o - mean) / jnp.sqrt(var + eps) * g + b


if __name__ == "__main__":
    key = jax.random.PRNGKey(0)
    k1, k2, k3 = jax.random.split(key, 3)

    N, C_IN, C_OUT, H, W = 2, 4, 8, 16, 16

    x = jax.random.normal(k1, (N, C_IN, H, W), dtype=jnp.float32)
    w1 = jax.random.normal(k2, (C_OUT // 2, C_IN, 1, 1), dtype=jnp.float32) * 0.1
    w2 = jax.random.normal(k3, (C_OUT // 2, C_IN, 1, 1), dtype=jnp.float32) * 0.1
    gamma = jnp.ones((C_OUT,), dtype=jnp.float32)   # BatchNorm2d init values
    beta = jnp.zeros((C_OUT,), dtype=jnp.float32)

    ref = _reference(x, w1, w2, gamma, beta)

    # f32 MXU path, y cached in VMEM (single read of x2d).
    out = jax.block_until_ready(factorized_reduce(x, w1, w2, gamma, beta))
    assert out.shape == (N, C_OUT, H // 2, W // 2), out.shape
    assert jnp.allclose(out, ref, atol=5e-4, rtol=5e-4), \
        float(jnp.max(jnp.abs(out - ref)))

    # Recompute fallback path (y slab too large for VMEM on big problems).
    out_nc = jax.block_until_ready(
        factorized_reduce(x, w1, w2, gamma, beta, force_no_cache=True))
    assert jnp.allclose(out_nc, ref, atol=5e-4, rtol=5e-4), \
        float(jnp.max(jnp.abs(out_nc - ref)))

    # bf16 HBM storage of x2d / weight; accumulation and BN stats stay f32.
    out_bf = jax.block_until_ready(
        factorized_reduce(x, w1, w2, gamma, beta, use_bf16=True))
    assert jnp.allclose(out_bf, ref, atol=5e-2, rtol=5e-2), \
        float(jnp.max(jnp.abs(out_bf - ref)))

    print("KERNEL_OK")
</pallas_src>

<mosaic_0001>
module attributes {stable_mosaic.version = 11 : i64} {
  func.func @_fused_kernel(%arg0: i32, %arg1: i32, %arg2: memref<128x4xf32, #tpu.memory_space<vmem>>, %arg3: memref<4x8xf32, #tpu.memory_space<vmem>>, %arg4: memref<1x8xf32, #tpu.memory_space<vmem>>, %arg5: memref<1x8xf32, #tpu.memory_space<vmem>>, %arg6: memref<128x8xf32, #tpu.memory_space<vmem>>, %arg7: memref<1x128x8xf32, #tpu.memory_space<vmem>>, %arg8: memref<1x8xf32, #tpu.memory_space<vmem>>, %arg9: memref<1x8xf32, #tpu.memory_space<vmem>>, %arg10: memref<1x8xf32, #tpu.memory_space<vmem>>, %arg11: memref<1x8xf32, #tpu.memory_space<vmem>>) attributes {dimension_semantics = [#tpu.dimension_semantics<arbitrary>, #tpu.dimension_semantics<arbitrary>], iteration_bounds = array<i64: 2, 1>, scalar_prefetch = 0 : i64, scratch_operands = 5 : i64, tpu.core_type = #tpu.core_type<tc>, window_params = [{transform_indices = @transform_0, window_bounds = array<i64: 128, 4>}, {pipeline_mode = #tpu.pipeline_mode<synchronous>, transform_indices = @transform_1, window_bounds = array<i64: 4, 8>}, {pipeline_mode = #tpu.pipeline_mode<synchronous>, transform_indices = @transform_2, window_bounds = array<i64: 1, 8>}, {pipeline_mode = #tpu.pipeline_mode<synchronous>, transform_indices = @transform_3, window_bounds = array<i64: 1, 8>}, {transform_indices = @transform_4, window_bounds = array<i64: 128, 8>}]} {
    %c0_i32 = arith.constant 0 : i32
    %0 = arith.cmpi eq, %arg0, %c0_i32 : i32
    %1 = arith.extui %0 : i1 to i32
    %c0_i32_0 = arith.constant 0 : i32
    %2 = arith.cmpi ne, %1, %c0_i32_0 : i32
    scf.if %2 {
      %c0_i32_5 = arith.constant 0 : i32
      %11 = arith.cmpi eq, %arg1, %c0_i32_5 : i32
      %12 = arith.extui %11 : i1 to i32
      %c0_i32_6 = arith.constant 0 : i32
      %13 = arith.cmpi ne, %12, %c0_i32_6 : i32
      scf.if %13 {
        %cst_23 = arith.constant 0.000000e+00 : f32
        %34 = vector.broadcast %cst_23 : f32 to vector<1x8xf32>
        %c0_24 = arith.constant 0 : index
        %c0_25 = arith.constant 0 : index
        %35 = vector.load %arg8[%c0_24, %c0_25] : memref<1x8xf32, #tpu.memory_space<vmem>>, vector<1x8xf32>
        tpu.vector_store %arg8[%c0_24, %c0_25], %34 {strides = array<i32>} : memref<1x8xf32, #tpu.memory_space<vmem>>, vector<1x8xf32>,
        %cst_26 = arith.constant 0.000000e+00 : f32
        %36 = vector.broadcast %cst_26 : f32 to vector<1x8xf32>
        %c0_27 = arith.constant 0 : index
        %c0_28 = arith.constant 0 : index
        %37 = vector.load %arg9[%c0_27, %c0_28] : memref<1x8xf32, #tpu.memory_space<vmem>>, vector<1x8xf32>
        tpu.vector_store %arg9[%c0_27, %c0_28], %36 {strides = array<i32>} : memref<1x8xf32, #tpu.memory_space<vmem>>, vector<1x8xf32>,
      } else {
      }
      %c0 = arith.constant 0 : index
      %c0_7 = arith.constant 0 : index
      %14 = vector.load %arg2[%c0, %c0_7] : memref<128x4xf32, #tpu.memory_space<vmem>>, vector<128x4xf32>
      %cst = arith.constant 0.000000e+00 : f32
      %15 = vector.broadcast %cst : f32 to vector<128x4xf32>
      %16 = arith.maximumf %14, %15 : vector<128x4xf32>
      %c0_8 = arith.constant 0 : index
      %c0_9 = arith.constant 0 : index
      %17 = vector.load %arg3[%c0_8, %c0_9] : memref<4x8xf32, #tpu.memory_space<vmem>>, vector<4x8xf32>
      %cst_10 = arith.constant dense<0.000000e+00> : vector<128x8xf32>
      %18 = tpu.matmul %16, %17, %cst_10 {dimension_numbers = #tpu.dot_dimension_numbers<[1], [0], [0], [1], [0, 0, 1, 1], [], []>} : vector<128x4xf32>, vector<4x8xf32>, vector<128x8xf32> -> vector<128x8xf32>
      %c0_11 = arith.constant 0 : index
      %c0_12 = arith.constant 0 : index
      %19 = vector.load %arg8[%c0_11, %c0_12] : memref<1x8xf32, #tpu.memory_space<vmem>>, vector<1x8xf32>
      %cst_13 = arith.constant dense<0.000000e+00> : vector<8xf32>
      %20 = vector.multi_reduction <add>, %18, %cst_13 [0] : vector<128x8xf32> to vector<8xf32>
      %21 = vector.shape_cast %20 : vector<8xf32> to vector<1x8xf32>
      %22 = arith.addf %19, %21 : vector<1x8xf32>
      %c0_14 = arith.constant 0 : index
      %c0_15 = arith.constant 0 : index
      %23 = vector.load %arg8[%c0_14, %c0_15] : memref<1x8xf32, #tpu.memory_space<vmem>>, vector<1x8xf32>
      tpu.vector_store %arg8[%c0_14, %c0_15], %22 {strides = array<i32>} : memref<1x8xf32, #tpu.memory_space<vmem>>, vector<1x8xf32>,
      %c0_16 = arith.constant 0 : index
      %c0_17 = arith.constant 0 : index
      %24 = vector.load %arg9[%c0_16, %c0_17] : memref<1x8xf32, #tpu.memory_space<vmem>>, vector<1x8xf32>
      %25 = arith.mulf %18, %18 : vector<128x8xf32>
      %cst_18 = arith.constant dense<0.000000e+00> : vector<8xf32>
      %26 = vector.multi_reduction <add>, %25, %cst_18 [0] : vector<128x8xf32> to vector<8xf32>
      %27 = vector.shape_cast %26 : vector<8xf32> to vector<1x8xf32>
      %28 = arith.addf %24, %27 : vector<1x8xf32>
      %c0_19 = arith.constant 0 : index
      %c0_20 = arith.constant 0 : index
      %29 = vector.load %arg9[%c0_19, %c0_20] : memref<1x8xf32, #tpu.memory_space<vmem>>, vector<1x8xf32>
      tpu.vector_store %arg9[%c0_19, %c0_20], %28 {strides = array<i32>} : memref<1x8xf32, #tpu.memory_space<vmem>>, vector<1x8xf32>,
      %30 = arith.index_cast %arg1 : i32 to index
      %c0_21 = arith.constant 0 : index
      %c0_22 = arith.constant 0 : index
      %31 = vector.load %arg7[%30, %c0_21, %c0_22] : memref<1x128x8xf32, #tpu.memory_space<vmem>>, vector<1x128x8xf32>
      %32 = vector.shape_cast %31 : vector<1x128x8xf32> to vector<128x8xf32>
      %33 = vector.shape_cast %18 : vector<128x8xf32> to vector<1x128x8xf32>
      tpu.vector_store %arg7[%30, %c0_21, %c0_22], %33 {strides = array<i32>} : memref<1x128x8xf32, #tpu.memory_space<vmem>>, vector<1x128x8xf32>,
    } else {
    }
    %c1_i32 = arith.constant 1 : i32
    %3 = arith.cmpi eq, %arg0, %c1_i32 : i32
    %c0_i32_1 = arith.constant 0 : i32
    %4 = arith.cmpi eq, %arg1, %c0_i32_1 : i32
    %5 = arith.andi %3, %4 : i1
    %6 = arith.extui %5 : i1 to i32
    %c0_i32_2 = arith.constant 0 : i32
    %7 = arith.cmpi ne, %6, %c0_i32_2 : i32
    scf.if %7 {
      %c0 = arith.constant 0 : index
      %c0_5 = arith.constant 0 : index
      %11 = vector.load %arg8[%c0, %c0_5] : memref<1x8xf32, #tpu.memory_space<vmem>>, vector<1x8xf32>
      %cst = arith.constant 1.280000e+02 : f32
      %12 = vector.broadcast %cst : f32 to vector<1x8xf32>
      %13 = arith.divf %11, %12 : vector<1x8xf32>
      %c0_6 = arith.constant 0 : index
      %c0_7 = arith.constant 0 : index
      %14 = vector.load %arg9[%c0_6, %c0_7] : memref<1x8xf32, #tpu.memory_space<vmem>>, vector<1x8xf32>
      %cst_8 = arith.constant 1.280000e+02 : f32
      %15 = vector.broadcast %cst_8 : f32 to vector<1x8xf32>
      %16 = arith.divf %14, %15 : vector<1x8xf32>
      %17 = arith.mulf %13, %13 : vector<1x8xf32>
      %18 = arith.subf %16, %17 : vector<1x8xf32>
      %cst_9 = arith.constant 0.000000e+00 : f32
      %19 = vector.broadcast %cst_9 : f32 to vector<1x8xf32>
      %20 = arith.maximumf %18, %19 : vector<1x8xf32>
      %cst_10 = arith.constant 9.99999974E-6 : f32
      %21 = vector.broadcast %cst_10 : f32 to vector<1x8xf32>
      %22 = arith.addf %20, %21 : vector<1x8xf32>
      %23 = math.rsqrt %22 : vector<1x8xf32>
      %c0_11 = arith.constant 0 : index
      %c0_12 = arith.constant 0 : index
      %24 = vector.load %arg4[%c0_11, %c0_12] : memref<1x8xf32, #tpu.memory_space<vmem>>, vector<1x8xf32>
      %25 = arith.mulf %24, %23 : vector<1x8xf32>
      %c0_13 = arith.constant 0 : index
      %c0_14 = arith.constant 0 : index
      %26 = vector.load %arg10[%c0_13, %c0_14] : memref<1x8xf32, #tpu.memory_space<vmem>>, vector<1x8xf32>
      tpu.vector_store %arg10[%c0_13, %c0_14], %25 {strides = array<i32>} : memref<1x8xf32, #tpu.memory_space<vmem>>, vector<1x8xf32>,
      %c0_15 = arith.constant 0 : index
      %c0_16 = arith.constant 0 : index
      %27 = vector.load %arg5[%c0_15, %c0_16] : memref<1x8xf32, #tpu.memory_space<vmem>>, vector<1x8xf32>
      %28 = arith.mulf %13, %25 : vector<1x8xf32>
      %29 = arith.subf %27, %28 : vector<1x8xf32>
      %c0_17 = arith.constant 0 : index
      %c0_18 = arith.constant 0 : index
      %30 = vector.load %arg11[%c0_17, %c0_18] : memref<1x8xf32, #tpu.memory_space<vmem>>, vector<1x8xf32>
      tpu.vector_store %arg11[%c0_17, %c0_18], %29 {strides = array<i32>} : memref<1x8xf32, #tpu.memory_space<vmem>>, vector<1x8xf32>,
    } else {
    }
    %c1_i32_3 = arith.constant 1 : i32
    %8 = arith.cmpi eq, %arg0, %c1_i32_3 : i32
    %9 = arith.extui %8 : i1 to i32
    %c0_i32_4 = arith.constant 0 : i32
    %10 = arith.cmpi ne, %9, %c0_i32_4 : i32
    scf.if %10 {
      %11 = arith.index_cast %arg1 : i32 to index
      %c0 = arith.constant 0 : index
      %c0_5 = arith.constant 0 : index
      %12 = vector.load %arg7[%11, %c0, %c0_5] : memref<1x128x8xf32, #tpu.memory_space<vmem>>, vector<1x128x8xf32>
      %13 = vector.shape_cast %12 : vector<1x128x8xf32> to vector<128x8xf32>
      %c0_6 = arith.constant 0 : index
      %c0_7 = arith.constant 0 : index
      %14 = vector.load %arg10[%c0_6, %c0_7] : memref<1x8xf32, #tpu.memory_space<vmem>>, vector<1x8xf32>
      %15 = vector.broadcast %14 : vector<1x8xf32> to vector<128x8xf32>
      %16 = arith.mulf %13, %15 : vector<128x8xf32>
      %c0_8 = arith.constant 0 : index
      %c0_9 = arith.constant 0 : index
      %17 = vector.load %arg11[%c0_8, %c0_9] : memref<1x8xf32, #tpu.memory_space<vmem>>, vector<1x8xf32>
      %18 = vector.broadcast %17 : vector<1x8xf32> to vector<128x8xf32>
      %19 = arith.addf %16, %18 : vector<128x8xf32>
      %c0_10 = arith.constant 0 : index
      %c0_11 = arith.constant 0 : index
      %20 = vector.load %arg6[%c0_10, %c0_11] : memref<128x8xf32, #tpu.memory_space<vmem>>, vector<128x8xf32>
      tpu.vector_store %arg6[%c0_10, %c0_11], %19 {strides = array<i32>} : memref<128x8xf32, #tpu.memory_space<vmem>>, vector<128x8xf32>,
    } else {
    }
    return
  }
  func.func @transform_0(%arg0: i32, %arg1: i32) -> (i32, i32) {
    %c1_i32 = arith.constant 1 : i32
    %0 = arith.subi %c1_i32, %arg0 : i32
    %1 = arith.muli %arg1, %0 : i32
    %c0_i32 = arith.constant 0 : i32
    %c0_i32_0 = arith.constant 0 : i32
    return %1, %c0_i32 : i32, i32
  }
  func.func @transform_1(%arg0: i32, %arg1: i32) -> (i32, i32) {
    %c0_i32 = arith.constant 0 : i32
    %c0_i32_0 = arith.constant 0 : i32
    %c0_i32_1 = arith.constant 0 : i32
    return %c0_i32, %c0_i32_0 : i32, i32
  }
  func.func @transform_2(%arg0: i32, %arg1: i32) -> (i32, i32) {
    %c0_i32 = arith.constant 0 : i32
    %c0_i32_0 = arith.constant 0 : i32
    %c0_i32_1 = arith.constant 0 : i32
    return %c0_i32, %c0_i32_0 : i32, i32
  }
  func.func @transform_3(%arg0: i32, %arg1: i32) -> (i32, i32) {
    %c0_i32 = arith.constant 0 : i32
    %c0_i32_0 = arith.constant 0 : i32
    %c0_i32_1 = arith.constant 0 : i32
    return %c0_i32, %c0_i32_0 : i32, i32
  }
  func.func @transform_4(%arg0: i32, %arg1: i32) -> (i32, i32) {
    %0 = arith.muli %arg1, %arg0 : i32
    %c0_i32 = arith.constant 0 : i32
    %c0_i32_0 = arith.constant 0 : i32
    return %0, %c0_i32 : i32, i32
  }
}

</mosaic_0001>

<llo_original>
// kernel: factorized_reduce.1
$region0: #{factorized_reduce.1}
  #allocation0 [shape = 'u32[]', space=smem, size = 0x4, offset = 0x4, fixed_abs, tag = 'smem constant byte address 0x4 - core index']
  #allocation1 [shape = 'u32[144,128]{1,0:T(1,128)}', space=vmem, size = 0x12000, scoped, tag = 'internal scratch']
  #allocation2 [shape = 'f32[1,128,8]{2,1,0:T(8,128)}', space=vmem, size = 0x10000, scoped, tag = 'scratch operand']
  #allocation3 [shape = 'f32[1,8]{1,0:T(1,128)}', space=vmem, size = 0x200, scoped, tag = 'scratch operand']
  #allocation4 [shape = 'f32[1,8]{1,0:T(1,128)}', space=vmem, size = 0x200, scoped, tag = 'scratch operand']
  #allocation5 [shape = 'f32[1,8]{1,0:T(1,128)}', space=vmem, size = 0x200, scoped, tag = 'scratch operand']
  #allocation6 [shape = 'f32[1,8]{1,0:T(1,128)}', space=vmem, size = 0x200, scoped, tag = 'scratch operand']
  %s0 = inlined_call_operand.vmem [shape: f32[128,4], index: 0, kind: input, shape index: {}]
  %s1 = inlined_call_operand.vmem [shape: f32[4,8], index: 1, kind: input, shape index: {}]
  %s2 = inlined_call_operand.vmem [shape: f32[1,8], index: 2, kind: input, shape index: {}]
  %s3 = inlined_call_operand.vmem [shape: f32[1,8], index: 3, kind: input, shape index: {}]
  %s4 = inlined_call_operand.vmem [shape: f32[128,8], index: 4, kind: output, shape index: {}]
  %s5 = sld [smem:[#allocation0]]
  $region65: #{factorized_reduce.1} parent=0
    _
  %s7 = ssub.s32 1, %s5
  %s8 = scalar_select 0, %s7, %s5
  loop: start=0, step=1, limit=4
  $region2: #{factorized_reduce.1} parent=0 // loop_pre_header
    _
  $region3: #{factorized_reduce.1} parent=0 // loop_header
    %s10 = sphi 0, %s14
    %p11 = scmp.ge.s32.totalorder %s10, 4
    %s17 = sphi 0, %s29
    %s18 = sphi 0, %s25
    %s19 = sphi 0, %s17
    %s20 = sphi 0, %s18
    %s21 = sphi 0, %s19
    %s22 = sphi 0, %s20
    %s36 = sphi 0, %s38
    %s39 = sphi 0, %s36
    %s40 = sphi 0, %s39
    %s56 = sphi 0, %s40
    %s60 = sphi 0, %s60
    %s62 = sphi 0, %s60
    %s63 = sphi 0, %s62
    %s77 = sphi 0, %s63
    %s81 = sphi 0, %s81
    %s83 = sphi 0, %s81
    %s84 = sphi 0, %s83
    %s98 = sphi 0, %s84
    %s102 = sphi 0, %s102
    %s104 = sphi 0, %s102
    %s105 = sphi 0, %s104
    %s119 = sphi 0, %s105
    %s127 = sphi 0, %s129
    %s130 = sphi 0, %s127
    %s131 = sphi 0, %s130
    %s147 = sphi 0, %s131
  $region4: #{factorized_reduce.1} parent=0 // loop_header_branch
    %13 = sbr.rel (%p11) target = $region8
  $region5: #{factorized_reduce.1} parent=0 // loop_body
    %s15 = ssub.s32 %s10, 1
    %s16 = ssub.s32 %s10, 2
    %s23 = sadd.s32 1, %s18
    %p24 = scmp.ge.s32.totalorder %s23, 1
    %s25 = scalar_select %p24, 0, %s23
    %s26 = sadd.s32 1, %s17
    %s27 = scalar_select %p24, %s26, %s17
    %p28 = scmp.ge.s32.totalorder %s27, 2
    %s29 = scalar_select %p28, 0, %s27
    %s30 = ssub.s32 1, %s17
    %s31 = smul.u32 %s18, %s30
    %s32 = ssub.s32 1, %s29
    %s33 = smul.u32 %s25, %s32
    %s34 = ssub.s32 %s31, %s33
    %p35 = scmp.eq.s32.totalorder %s34, 0
    %s37 = sadd.s32 %s36, 1
    %s38 = scalar_select %p35, %s36, %s37
    %p41 = pneg %p35
    %p42 = scmp.eq.s32.totalorder %s10, 1
    %p43 = por %p41, %p42
    %p44 = scmp.ne.s32.totalorder %s36, %s39
    %p45 = scmp.eq.s32.totalorder %s10, 0
    %p46 = por %p44, %p45
    %p47 = scmp.ne.s32.totalorder %s36, %s39
    %p48 = scmp.eq.s32.totalorder %s15, 1
    %p49 = por %p47, %p48
    %p50 = scmp.ne.s32.totalorder %s39, %s40
    %p51 = scmp.eq.s32.totalorder %s15, 0
    %p52 = por %p50, %p51
    %p53 = scmp.ne.s32.totalorder %s39, %s40
    %p54 = scmp.eq.s32.totalorder %s16, 1
    %p55 = por %p53, %p54
    %p57 = scmp.ne.s32.totalorder %s40, %s56
    %p58 = scmp.eq.s32.totalorder %s16, 0
    %p59 = por %p57, %p58
    %s61 = sadd.s32 %s60, 1
    %p64 = scmp.eq.s32.totalorder %s10, 1
    %p65 = scmp.ne.s32.totalorder %s60, %s62
    %p66 = scmp.eq.s32.totalorder %s10, 0
    %p67 = por %p65, %p66
    %p68 = scmp.ne.s32.totalorder %s60, %s62
    %p69 = scmp.eq.s32.totalorder %s15, 1
    %p70 = por %p68, %p69
    %p71 = scmp.ne.s32.totalorder %s62, %s63
    %p72 = scmp.eq.s32.totalorder %s15, 0
    %p73 = por %p71, %p72
    %p74 = scmp.ne.s32.totalorder %s62, %s63
    %p75 = scmp.eq.s32.totalorder %s16, 1
    %p76 = por %p74, %p75
    %p78 = scmp.ne.s32.totalorder %s63, %s77
    %p79 = scmp.eq.s32.totalorder %s16, 0
    %p80 = por %p78, %p79
    %s82 = sadd.s32 %s81, 1
    %p85 = scmp.eq.s32.totalorder %s10, 1
    %p86 = scmp.ne.s32.totalorder %s81, %s83
    %p87 = scmp.eq.s32.totalorder %s10, 0
    %p88 = por %p86, %p87
    %p89 = scmp.ne.s32.totalorder %s81, %s83
    %p90 = scmp.eq.s32.totalorder %s15, 1
    %p91 = por %p89, %p90
    %p92 = scmp.ne.s32.totalorder %s83, %s84
    %p93 = scmp.eq.s32.totalorder %s15, 0
    %p94 = por %p92, %p93
    %p95 = scmp.ne.s32.totalorder %s83, %s84
    %p96 = scmp.eq.s32.totalorder %s16, 1
    %p97 = por %p95, %p96
    %p99 = scmp.ne.s32.totalorder %s84, %s98
    %p100 = scmp.eq.s32.totalorder %s16, 0
    %p101 = por %p99, %p100
    %s103 = sadd.s32 %s102, 1
    %p106 = scmp.eq.s32.totalorder %s10, 1
    %p107 = scmp.ne.s32.totalorder %s102, %s104
    %p108 = scmp.eq.s32.totalorder %s10, 0
    %p109 = por %p107, %p108
    %p110 = scmp.ne.s32.totalorder %s102, %s104
    %p111 = scmp.eq.s32.totalorder %s15, 1
    %p112 = por %p110, %p111
    %p113 = scmp.ne.s32.totalorder %s104, %s105
    %p114 = scmp.eq.s32.totalorder %s15, 0
    %p115 = por %p113, %p114
    %p116 = scmp.ne.s32.totalorder %s104, %s105
    %p117 = scmp.eq.s32.totalorder %s16, 1
    %p118 = por %p116, %p117
    %p120 = scmp.ne.s32.totalorder %s105, %s119
    %p121 = scmp.eq.s32.totalorder %s16, 0
    %p122 = por %p120, %p121
    %s123 = smul.u32 %s18, %s17
    %s124 = smul.u32 %s25, %s29
    %s125 = ssub.s32 %s123, %s124
    %p126 = scmp.eq.s32.totalorder %s125, 0
    %s128 = sadd.s32 %s127, 1
    %s129 = scalar_select %p126, %s127, %s128
    %p132 = pneg %p126
    %p133 = scmp.eq.s32.totalorder %s10, 1
    %p134 = por %p132, %p133
    %p135 = scmp.ne.s32.totalorder %s127, %s130
    %p136 = scmp.eq.s32.totalorder %s10, 0
    %p137 = por %p135, %p136
    %p138 = scmp.ne.s32.totalorder %s127, %s130
    %p139 = scmp.eq.s32.totalorder %s15, 1
    %p140 = por %p138, %p139
    %p141 = scmp.ne.s32.totalorder %s130, %s131
    %p142 = scmp.eq.s32.totalorder %s15, 0
    %p143 = por %p141, %p142
    %p144 = scmp.ne.s32.totalorder %s130, %s131
    %p145 = scmp.eq.s32.totalorder %s16, 1
    %p146 = por %p144, %p145
    %p148 = scmp.ne.s32.totalorder %s131, %s147
    %p149 = scmp.eq.s32.totalorder %s16, 0
    %p150 = por %p148, %p149
    %p151 = scmp.le.s32.totalorder 1, %s10
    %p152 = scmp.lt.s32.totalorder %s10, 3
    %p153 = pnand %p151, %p152
    %p154 = pneg %p153
    // Predicated region
    $region9: #{factorized_reduce.1} parent=5 // pred_check
      _
    $region10: #{factorized_reduce.1} parent=5 // pred_check_branch
      %156 = sbr.rel (%p153) target = $region12
    $region11: #{factorized_reduce.1} parent=5 // pred_region
      %s157 = ssub.s32 %s10, 1
      // Predicated region
      $region13: #{factorized_reduce.1} parent=11 // pred_check
        %p158 = pneg %p73
      $region14: #{factorized_reduce.1} parent=11 // pred_check_branch
        %160 = sbr.rel (%p158) target = $region16
      $region15: #{factorized_reduce.1} parent=11 // pred_region
        _
      $region16: #{factorized_reduce.1} parent=11 // pred_fallthru
        _
      // Predicated region
      $region17: #{factorized_reduce.1} parent=11 // pred_check
        %p161 = pneg %p94
      $region18: #{factorized_reduce.1} parent=11 // pred_check_branch
        %163 = sbr.rel (%p161) target = $region20
      $region19: #{factorized_reduce.1} parent=11 // pred_region
        _
      $region20: #{factorized_reduce.1} parent=11 // pred_fallthru
        _
      // Predicated region
      $region21: #{factorized_reduce.1} parent=11 // pred_check
        %p164 = pneg %p115
      $region22: #{factorized_reduce.1} parent=11 // pred_check_branch
        %166 = sbr.rel (%p164) target = $region24
      $region23: #{factorized_reduce.1} parent=11 // pred_region
        _
      $region24: #{factorized_reduce.1} parent=11 // pred_fallthru
        _
    $region12: #{factorized_reduce.1} parent=5 // pred_fallthru
      _
    %p167 = scmp.lt.s32.totalorder %s10, 2
    // Predicated region
    $region25: #{factorized_reduce.1} parent=5 // pred_check
      %p168 = pneg %p167
    $region26: #{factorized_reduce.1} parent=5 // pred_check_branch
      %170 = sbr.rel (%p168) target = $region28
    $region27: #{factorized_reduce.1} parent=5 // pred_region
      // Predicated region
      $region29: #{factorized_reduce.1} parent=27 // pred_check
        %p171 = pneg %p46
      $region30: #{factorized_reduce.1} parent=27 // pred_check_branch
        %173 = sbr.rel (%p171) target = $region32
      $region31: #{factorized_reduce.1} parent=27 // pred_region
        %s174 = ssub.s32 1, %s17
        %s175 = smul.u32 %s18, %s174
        %s176 = smul.u32 16, %s175
        %p177 = scmp.lt.s32.totalorder %s176, 15
        %s178 = scalar_select %p177, %s176, 15
        %s179 = smul.addr %s178, 8
        %s180 = scalar_lea.vmem %s0, %s179
        %s181 = ssub.s32 1, %s17
        %s182 = smul.u32 %s18, %s181
        %s183 = smul.u32 16, %s182
      $region32: #{factorized_reduce.1} parent=27 // pred_fallthru
        _
    $region28: #{factorized_reduce.1} parent=5 // pred_fallthru
      _
    %p184 = scmp.le.s32.totalorder 1, %s10
    %p185 = scmp.lt.s32.totalorder %s10, 3
    %p186 = pnand %p184, %p185
    %p187 = pneg %p186
    // Predicated region
    $region33: #{factorized_reduce.1} parent=5 // pred_check
      _
    $region34: #{factorized_reduce.1} parent=5 // pred_check_branch
      %189 = sbr.rel (%p186) target = $region36
    $region35: #{factorized_reduce.1} parent=5 // pred_region
      %s190 = ssub.s32 %s10, 1
      %s191 = ssub.s32 1, %s19
      %s192 = smul.u32 %s20, %s191
      %s193 = smul.u32 16, %s192
      %p194 = scmp.lt.s32.totalorder %s193, 15
      %s195 = scalar_select %p194, %s193, 15
      %s196 = smul.addr %s195, 8
      %s197 = scalar_lea.vmem %s0, %s196
      %p198 = pneg %p52
      %p199 = pneg %p49
      %p200 = pneg %p73
      %p201 = pneg %p70
      %p202 = pneg %p94
      %p203 = pneg %p91
      %p204 = pneg %p115
      %p205 = pneg %p112
      %p206 = pneg %p143
      %p207 = pneg %p140
      %s208 = smul.u32 %s20, %s19
      %s209 = smul.u32 16, %s208
      %p210 = scmp.lt.s32.totalorder %s209, 15
      %s211 = scalar_select %p210, %s209, 15
      %s212 = smul.addr %s211, 8
      %s213 = scalar_lea.vmem %s4, %s212
      %s214 = ssub.s32 1, %s19
      %s215 = smul.u32 %s20, %s214
      %s216 = smul.u32 16, %s215
      %p217 = scmp.lt.s32.totalorder %s216, 15
      %s218 = scalar_select %p217, %s216, 15
      %s219 = smul.addr %s218, 8
      %s220 = scalar_lea.vmem %s0, %s219
      %s221 = ssub.s32 1, %s19
      %s222 = smul.u32 %s20, %s221
      %s223 = smul.u32 16, %s222
      %s224 = smul.u32 %s20, %s19
      %s225 = smul.u32 16, %s224
      %p226 = scmp.lt.s32.totalorder %s225, 15
      %s227 = scalar_select %p226, %s225, 15
      %s228 = smul.addr %s227, 8
      %s229 = scalar_lea.vmem %s4, %s228
      %s230 = smul.u32 %s20, %s19
      %s231 = smul.u32 16, %s230
      %p232 = scmp.eq.s32.totalorder %s19, 0
      // Predicated region
      $region37: #{factorized_reduce.1} parent=35 // pred_check
        %p233 = pneg %p232
      $region38: #{factorized_reduce.1} parent=35 // pred_check_branch
        %235 = sbr.rel (%p233) target = $region40
      $region39: #{factorized_reduce.1} parent=35 // pred_region
        %p236 = scmp.eq.s32.totalorder %s20, 0
        // Predicated region
        $region41: #{factorized_reduce.1} parent=39 // pred_check
          %p237 = pneg %p236
        $region42: #{factorized_reduce.1} parent=39 // pred_check_branch
          %239 = sbr.rel (%p237) target = $region44
        $region43: #{factorized_reduce.1} parent=39 // pred_region
          %vm240 = vcmask 57344
          %241 = vst.msk [vmem:[#allocation3] sm:$0x1] %vm240, 0.0
          %242 = vst.msk [vmem:[#allocation4] sm:$0x1] %vm240, 0.0
        $region44: #{factorized_reduce.1} parent=39 // pred_fallthru
          _
        %v243 = vld [vmem:[%s220] sm:$0xff]
        %v244 = vld [vmem:[%s220 + $0x8] sm:$0xff]
        %v245 = vld [vmem:[%s220 + $0x10] sm:$0xff]
        %v246 = vld [vmem:[%s220 + $0x18] sm:$0xff]
        %v247 = vld [vmem:[%s220 + $0x20] sm:$0xff]
        %v248 = vld [vmem:[%s220 + $0x28] sm:$0xff]
        %v249 = vld [vmem:[%s220 + $0x30] sm:$0xff]
        %v250 = vld [vmem:[%s220 + $0x38] sm:$0xff]
        %v251 = vld [vmem:[%s220 + $0x40] sm:$0xff]
        %v252 = vld [vmem:[%s220 + $0x48] sm:$0xff]
        %v253 = vld [vmem:[%s220 + $0x50] sm:$0xff]
        %v254 = vld [vmem:[%s220 + $0x58] sm:$0xff]
        %v255 = vld [vmem:[%s220 + $0x60] sm:$0xff]
        %v256 = vld [vmem:[%s220 + $0x68] sm:$0xff]
        %v257 = vld [vmem:[%s220 + $0x70] sm:$0xff]
        %v258 = vld [vmem:[%s220 + $0x78] sm:$0xff]
        %v259 = vmax.f32 %v243, 0.0
        %v260 = vmax.f32 %v244, 0.0
        %v261 = vmax.f32 %v245, 0.0
        %v262 = vmax.f32 %v246, 0.0
        %v263 = vmax.f32 %v247, 0.0
        %v264 = vmax.f32 %v248, 0.0
        %v265 = vmax.f32 %v249, 0.0
        %v266 = vmax.f32 %v250, 0.0
        %v267 = vmax.f32 %v251, 0.0
        %v268 = vmax.f32 %v252, 0.0
        %v269 = vmax.f32 %v253, 0.0
        %v270 = vmax.f32 %v254, 0.0
        %v271 = vmax.f32 %v255, 0.0
        %v272 = vmax.f32 %v256, 0.0
        %v273 = vmax.f32 %v257, 0.0
        %v274 = vmax.f32 %v258, 0.0
        %v275 = vld [vmem:[%s1] sm:$0xf]
        %vm276 = vcmask 31744
        %v278 = vsel %vm276, %v259, 0
        %v281 = vsel %vm276, %v260, 0
        %v284 = vsel %vm276, %v261, 0
        %v287 = vsel %vm276, %v262, 0
        %v290 = vsel %vm276, %v263, 0
        %v293 = vsel %vm276, %v264, 0
        %v296 = vsel %vm276, %v265, 0
        %v299 = vsel %vm276, %v266, 0
        %v302 = vsel %vm276, %v267, 0
        %v305 = vsel %vm276, %v268, 0
        %v308 = vsel %vm276, %v269, 0
        %v311 = vsel %vm276, %v270, 0
        %v314 = vsel %vm276, %v271, 0
        %v317 = vsel %vm276, %v272, 0
        %v320 = vsel %vm276, %v273, 0
        %v323 = vsel %vm276, %v274, 0
        %vm325 = vcmask 1043456
        %v327 = vsel %vm325, %v275, 0
        %329 = vmatprep.subr.mxu0 0.0
        %330 = vmatpush1.msra.mxu0 0.0
        %331 = vmatprep.subr.mxu0 0.0
        %332 = vmatpush1.msra.mxu0 0.0
        %333 = vmatprep.subr.mxu0 0.0
        %334 = vmatpush1.msra.mxu0 0.0
        %335 = vmatprep.subr.mxu0 0.0
        %336 = vmatpush1.msra.mxu0 0.0
        %337 = vmatprep.subr.mxu0 0.0
        %338 = vmatpush1.msra.mxu0 0.0
        %339 = vmatprep.subr.mxu0 0.0
        %340 = vmatpush1.msra.mxu0 0.0
        %341 = vmatprep.subr.mxu0 0.0
        %342 = vmatpush1.msra.mxu0 0.0
        %343 = vmatprep.subr.mxu0 0.0
        %344 = vmatpush1.msra.mxu0 0.0
        %345 = vmatprep.subr.mxu0 0.0
        %346 = vmatpush1.msra.mxu0 0.0
        %347 = vmatprep.subr.mxu0 0.0
        %348 = vmatpush1.msra.mxu0 0.0
        %349 = vmatprep.subr.mxu0 0.0
        %350 = vmatpush1.msra.mxu0 0.0
        %351 = vmatprep.subr.mxu0 0.0
        %352 = vmatpush1.msra.mxu0 0.0
        %353 = vmatprep.subr.mxu0 0.0
        %354 = vmatpush1.msra.mxu0 0.0
        %355 = vmatprep.subr.mxu0 0.0
        %356 = vmatpush1.msra.mxu0 0.0
        %357 = vmatprep.subr.mxu0 0.0
        %358 = vmatpush1.msra.mxu0 0.0
        %359 = vmatprep.subr.mxu0 0.0
        %360 = vmatpush1.msra.mxu0 %v327
        %361 = vmatprep.subr.mxu0 0.0
        %362 = vmatpush2.msra.mxu0 0.0
        %363 = vmatprep.subr.mxu0 0.0
        %364 = vmatpush2.msra.mxu0 0.0
        %365 = vmatprep.subr.mxu0 0.0
        %366 = vmatpush2.msra.mxu0 0.0
        %367 = vmatprep.subr.mxu0 0.0
        %368 = vmatpush2.msra.mxu0 0.0
        %369 = vmatprep.subr.mxu0 0.0
        %370 = vmatpush2.msra.mxu0 0.0
        %371 = vmatprep.subr.mxu0 0.0
        %372 = vmatpush2.msra.mxu0 0.0
        %373 = vmatprep.subr.mxu0 0.0
        %374 = vmatpush2.msra.mxu0 0.0
        %375 = vmatprep.subr.mxu0 0.0
        %376 = vmatpush2.msra.mxu0 0.0
        %377 = vmatprep.subr.mxu0 0.0
        %378 = vmatpush2.msra.mxu0 0.0
        %379 = vmatprep.subr.mxu0 0.0
        %380 = vmatpush2.msra.mxu0 0.0
        %381 = vmatprep.subr.mxu0 0.0
        %382 = vmatpush2.msra.mxu0 0.0
        %383 = vmatprep.subr.mxu0 0.0
        %384 = vmatpush2.msra.mxu0 0.0
        %385 = vmatprep.subr.mxu0 0.0
        %386 = vmatpush2.msra.mxu0 0.0
        %387 = vmatprep.subr.mxu0 0.0
        %388 = vmatpush2.msra.mxu0 0.0
        %389 = vmatprep.subr.mxu0 0.0
        %390 = vmatpush2.msra.mxu0 0.0
        %391 = vmatprep.subr.mxu0 0.0
        %392 = vmatpush2.msra.mxu0 0.0
        %393 = vmatprep.mubr.f32.mxu0 0.0
        %394 = vmatmul.mubr.f32.gmra.mxu0 %v278
        %v395 = vpop.f32.mrf.mxu0
        %v396 = vadd.f32 0.0, %v395
        %v397 = vpop.f32.mrf.mxu0
        %398 = vmatprep.mubr.f32.mxu0 0.0
        %399 = vmatmul.mubr.f32.gmra.mxu0 %v281
        %v400 = vpop.f32.mrf.mxu0
        %v401 = vadd.f32 0.0, %v400
        %v402 = vpop.f32.mrf.mxu0
        %403 = vmatprep.mubr.f32.mxu0 0.0
        %404 = vmatmul.mubr.f32.gmra.mxu0 %v284
        %v405 = vpop.f32.mrf.mxu0
        %v406 = vadd.f32 0.0, %v405
        %v407 = vpop.f32.mrf.mxu0
        %408 = vmatprep.mubr.f32.mxu0 0.0
        %409 = vmatmul.mubr.f32.gmra.mxu0 %v287
        %v410 = vpop.f32.mrf.mxu0
        %v411 = vadd.f32 0.0, %v410
        %v412 = vpop.f32.mrf.mxu0
        %413 = vmatprep.mubr.f32.mxu0 0.0
        %414 = vmatmul.mubr.f32.gmra.mxu0 %v290
        %v415 = vpop.f32.mrf.mxu0
        %v416 = vadd.f32 0.0, %v415
        %v417 = vpop.f32.mrf.mxu0
        %418 = vmatprep.mubr.f32.mxu0 0.0
        %419 = vmatmul.mubr.f32.gmra.mxu0 %v293
        %v420 = vpop.f32.mrf.mxu0
        %v421 = vadd.f32 0.0, %v420
        %v422 = vpop.f32.mrf.mxu0
        %423 = vmatprep.mubr.f32.mxu0 0.0
        %424 = vmatmul.mubr.f32.gmra.mxu0 %v296
        %v425 = vpop.f32.mrf.mxu0
        %v426 = vadd.f32 0.0, %v425
        %v427 = vpop.f32.mrf.mxu0
        %428 = vmatprep.mubr.f32.mxu0 0.0
        %429 = vmatmul.mubr.f32.gmra.mxu0 %v299
        %v430 = vpop.f32.mrf.mxu0
        %v431 = vadd.f32 0.0, %v430
        %v432 = vpop.f32.mrf.mxu0
        %433 = vmatprep.mubr.f32.mxu0 0.0
        %434 = vmatmul.mubr.f32.gmra.mxu0 %v302
        %v435 = vpop.f32.mrf.mxu0
        %v436 = vadd.f32 0.0, %v435
        %v437 = vpop.f32.mrf.mxu0
        %438 = vmatprep.mubr.f32.mxu0 0.0
        %439 = vmatmul.mubr.f32.gmra.mxu0 %v305
        %v440 = vpop.f32.mrf.mxu0
        %v441 = vadd.f32 0.0, %v440
        %v442 = vpop.f32.mrf.mxu0
        %443 = vmatprep.mubr.f32.mxu0 0.0
        %444 = vmatmul.mubr.f32.gmra.mxu0 %v308
        %v445 = vpop.f32.mrf.mxu0
        %v446 = vadd.f32 0.0, %v445
        %v447 = vpop.f32.mrf.mxu0
        %448 = vmatprep.mubr.f32.mxu0 0.0
        %449 = vmatmul.mubr.f32.gmra.mxu0 %v311
        %v450 = vpop.f32.mrf.mxu0
        %v451 = vadd.f32 0.0, %v450
        %v452 = vpop.f32.mrf.mxu0
        %453 = vmatprep.mubr.f32.mxu0 0.0
        %454 = vmatmul.mubr.f32.gmra.mxu0 %v314
        %v455 = vpop.f32.mrf.mxu0
        %v456 = vadd.f32 0.0, %v455
        %v457 = vpop.f32.mrf.mxu0
        %458 = vmatprep.mubr.f32.mxu0 0.0
        %459 = vmatmul.mubr.f32.gmra.mxu0 %v317
        %v460 = vpop.f32.mrf.mxu0
        %v461 = vadd.f32 0.0, %v460
        %v462 = vpop.f32.mrf.mxu0
        %463 = vmatprep.mubr.f32.mxu0 0.0
        %464 = vmatmul.mubr.f32.gmra.mxu0 %v320
        %v465 = vpop.f32.mrf.mxu0
        %v466 = vadd.f32 0.0, %v465
        %v467 = vpop.f32.mrf.mxu0
        %468 = vmatprep.mubr.f32.mxu0 0.0
        %469 = vmatmul.mubr.f32.gmra.mxu0 %v323
        %v470 = vpop.f32.mrf.mxu0
        %v471 = vadd.f32 0.0, %v470
        %v472 = vpop.f32.mrf.mxu0
        %473 = vdwg.mxu0
        %v474 = vld [vmem:[#allocation3] sm:$0x1]
        %vm475 = vcmask 64512
        %v476 = vsel %vm475, %v396, 0.0
        %v477 = vsel %vm475, %v401, 0.0
        %v478 = vadd.f32 %v476, %v477
        %v479 = vsel %vm475, %v406, 0.0
        %v480 = vadd.f32 %v478, %v479
        %v481 = vsel %vm475, %v411, 0.0
        %v482 = vadd.f32 %v480, %v481
        %v483 = vsel %vm475, %v416, 0.0
        %v484 = vadd.f32 %v482, %v483
        %v485 = vsel %vm475, %v421, 0.0
        %v486 = vadd.f32 %v484, %v485
        %v487 = vsel %vm475, %v426, 0.0
        %v488 = vadd.f32 %v486, %v487
        %v489 = vsel %vm475, %v431, 0.0
        %v490 = vadd.f32 %v488, %v489
        %v491 = vsel %vm475, %v436, 0.0
        %v492 = vadd.f32 %v490, %v491
        %v493 = vsel %vm475, %v441, 0.0
        %v494 = vadd.f32 %v492, %v493
        %v495 = vsel %vm475, %v446, 0.0
        %v496 = vadd.f32 %v494, %v495
        %v497 = vsel %vm475, %v451, 0.0
        %v498 = vadd.f32 %v496, %v497
        %v499 = vsel %vm475, %v456, 0.0
        %v500 = vadd.f32 %v498, %v499
        %v501 = vsel %vm475, %v461, 0.0
        %v502 = vadd.f32 %v500, %v501
        %v503 = vsel %vm475, %v466, 0.0
        %v504 = vadd.f32 %v502, %v503
        %v505 = vsel %vm475, %v471, 0.0
        %v506 = vadd.f32 %v504, %v505
        %v507 = vrot.slane %v506, 4
        %v508 = vadd.f32 %v506, %v507
        %v509 = vrot.slane %v508, 2
        %v510 = vadd.f32 %v508, %v509
        %v511 = vrot.slane %v510, 1
        %v512 = vadd.f32 %v510, %v511
        %v513 = vadd.f32 %v474, %v512
        %vm514 = vcmask 57344
        %515 = vst.msk [vmem:[#allocation3] sm:$0x1] %vm514, %v513
        %v516 = vld [vmem:[#allocation4] sm:$0x1]
        %v517 = vmul.f32 %v396, %v396
        %v518 = vmul.f32 %v401, %v401
        %v519 = vmul.f32 %v406, %v406
        %v520 = vmul.f32 %v411, %v411
        %v521 = vmul.f32 %v416, %v416
        %v522 = vmul.f32 %v421, %v421
        %v523 = vmul.f32 %v426, %v426
        %v524 = vmul.f32 %v431, %v431
        %v525 = vmul.f32 %v436, %v436
        %v526 = vmul.f32 %v441, %v441
        %v527 = vmul.f32 %v446, %v446
        %v528 = vmul.f32 %v451, %v451
        %v529 = vmul.f32 %v456, %v456
        %v530 = vmul.f32 %v461, %v461
        %v531 = vmul.f32 %v466, %v466
        %v532 = vmul.f32 %v471, %v471
        %v533 = vsel %vm475, %v517, 0.0
        %v534 = vsel %vm475, %v518, 0.0
        %v535 = vadd.f32 %v533, %v534
        %v536 = vsel %vm475, %v519, 0.0
        %v537 = vadd.f32 %v535, %v536
        %v538 = vsel %vm475, %v520, 0.0
        %v539 = vadd.f32 %v537, %v538
        %v540 = vsel %vm475, %v521, 0.0
        %v541 = vadd.f32 %v539, %v540
        %v542 = vsel %vm475, %v522, 0.0
        %v543 = vadd.f32 %v541, %v542
        %v544 = vsel %vm475, %v523, 0.0
        %v545 = vadd.f32 %v543, %v544
        %v546 = vsel %vm475, %v524, 0.0
        %v547 = vadd.f32 %v545, %v546
        %v548 = vsel %vm475, %v525, 0.0
        %v549 = vadd.f32 %v547, %v548
        %v550 = vsel %vm475, %v526, 0.0
        %v551 = vadd.f32 %v549, %v550
        %v552 = vsel %vm475, %v527, 0.0
        %v553 = vadd.f32 %v551, %v552
        %v554 = vsel %vm475, %v528, 0.0
        %v555 = vadd.f32 %v553, %v554
        %v556 = vsel %vm475, %v529, 0.0
        %v557 = vadd.f32 %v555, %v556
        %v558 = vsel %vm475, %v530, 0.0
        %v559 = vadd.f32 %v557, %v558
        %v560 = vsel %vm475, %v531, 0.0
        %v561 = vadd.f32 %v559, %v560
        %v562 = vsel %vm475, %v532, 0.0
        %v563 = vadd.f32 %v561, %v562
        %v564 = vrot.slane %v563, 4
        %v565 = vadd.f32 %v563, %v564
        %v566 = vrot.slane %v565, 2
        %v567 = vadd.f32 %v565, %v566
        %v568 = vrot.slane %v567, 1
        %v569 = vadd.f32 %v567, %v568
        %v570 = vadd.f32 %v516, %v569
        %571 = vst.msk [vmem:[#allocation4] sm:$0x1] %vm514, %v570
        %s572 = smul.u32 %s20, 128
        %s573 = scalar_lea.vmem [#allocation2], %s572
        %574 = vst.msk [vmem:[%s573] sm:$0xff] %vm475, %v396
        %575 = vst.msk [vmem:[%s573 + $0x8] sm:$0xff] %vm475, %v401
        %576 = vst.msk [vmem:[%s573 + $0x10] sm:$0xff] %vm475, %v406
        %577 = vst.msk [vmem:[%s573 + $0x18] sm:$0xff] %vm475, %v411
        %578 = vst.msk [vmem:[%s573 + $0x20] sm:$0xff] %vm475, %v416
        %579 = vst.msk [vmem:[%s573 + $0x28] sm:$0xff] %vm475, %v421
        %580 = vst.msk [vmem:[%s573 + $0x30] sm:$0xff] %vm475, %v426
        %581 = vst.msk [vmem:[%s573 + $0x38] sm:$0xff] %vm475, %v431
        %582 = vst.msk [vmem:[%s573 + $0x40] sm:$0xff] %vm475, %v436
        %583 = vst.msk [vmem:[%s573 + $0x48] sm:$0xff] %vm475, %v441
        %584 = vst.msk [vmem:[%s573 + $0x50] sm:$0xff] %vm475, %v446
        %585 = vst.msk [vmem:[%s573 + $0x58] sm:$0xff] %vm475, %v451
        %586 = vst.msk [vmem:[%s573 + $0x60] sm:$0xff] %vm475, %v456
        %587 = vst.msk [vmem:[%s573 + $0x68] sm:$0xff] %vm475, %v461
        %588 = vst.msk [vmem:[%s573 + $0x70] sm:$0xff] %vm475, %v466
        %589 = vst.msk [vmem:[%s573 + $0x78] sm:$0xff] %vm475, %v471
      $region40: #{factorized_reduce.1} parent=35 // pred_fallthru
        _
      %p590 = scmp.eq.s32.totalorder %s19, 1
      %p591 = scmp.eq.s32.totalorder %s20, 0
      %p592 = pnand %p590, %p591
      %p593 = pneg %p592
      // Predicated region
      $region45: #{factorized_reduce.1} parent=35 // pred_check
        _
      $region46: #{factorized_reduce.1} parent=35 // pred_check_branch
        %595 = sbr.rel (%p592) target = $region48
      $region47: #{factorized_reduce.1} parent=35 // pred_region
        %v596 = vld [vmem:[#allocation3] sm:$0x1]
        %v597 = vrcp.pop 128.0
        %v598 = vmul.f32 %v596, %v597
        %v599 = vld [vmem:[#allocation4] sm:$0x1]
        %v600 = vmul.f32 %v599, %v597
        %v601 = vmul.f32 %v598, %v598
        %v602 = vsub.f32 %v600, %v601
        %v603 = vmax.f32 %v602, 0.0
        %v604 = vadd.f32 %v603, 1e-05
        %v605 = vrsqrt.pop %v604
        %v606 = vld [vmem:[%s2] sm:$0x1]
        %v607 = vmul.f32 %v606, %v605
        %vm608 = vcmask 57344
        %609 = vst.msk [vmem:[#allocation5] sm:$0x1] %vm608, %v607
        %v610 = vld [vmem:[%s3] sm:$0x1]
        %v611 = vmul.f32 %v598, %v607
        %v612 = vsub.f32 %v610, %v611
        %613 = vst.msk [vmem:[#allocation6] sm:$0x1] %vm608, %v612
      $region48: #{factorized_reduce.1} parent=35 // pred_fallthru
        _
      // Predicated region
      $region49: #{factorized_reduce.1} parent=35 // pred_check
        %p614 = pneg %p590
      $region50: #{factorized_reduce.1} parent=35 // pred_check_branch
        %616 = sbr.rel (%p614) target = $region52
      $region51: #{factorized_reduce.1} parent=35 // pred_region
        %s617 = smul.u32 %s20, 128
        %s618 = scalar_lea.vmem [#allocation2], %s617
        %v619 = vld [vmem:[%s618] sm:$0xff]
        %v620 = vld [vmem:[%s618 + $0x8] sm:$0xff]
        %v621 = vld [vmem:[%s618 + $0x10] sm:$0xff]
        %v622 = vld [vmem:[%s618 + $0x18] sm:$0xff]
        %v623 = vld [vmem:[%s618 + $0x20] sm:$0xff]
        %v624 = vld [vmem:[%s618 + $0x28] sm:$0xff]
        %v625 = vld [vmem:[%s618 + $0x30] sm:$0xff]
        %v626 = vld [vmem:[%s618 + $0x38] sm:$0xff]
        %v627 = vld [vmem:[%s618 + $0x40] sm:$0xff]
        %v628 = vld [vmem:[%s618 + $0x48] sm:$0xff]
        %v629 = vld [vmem:[%s618 + $0x50] sm:$0xff]
        %v630 = vld [vmem:[%s618 + $0x58] sm:$0xff]
        %v631 = vld [vmem:[%s618 + $0x60] sm:$0xff]
        %v632 = vld [vmem:[%s618 + $0x68] sm:$0xff]
        %v633 = vld [vmem:[%s618 + $0x70] sm:$0xff]
        %v634 = vld [vmem:[%s618 + $0x78] sm:$0xff]
        %v635 = vld [vmem:[#allocation5] sm:$0x1]
        %v637 = vlaneseq
        %v638 = vshrl.u32 %v637, 7
        %v639 = vsub.s32 0, %v638
        %v640 = vrot.slane %v635, %v639
        %v642 = vmul.f32 %v619, %v640
        %v643 = vmul.f32 %v620, %v640
        %v644 = vmul.f32 %v621, %v640
        %v645 = vmul.f32 %v622, %v640
        %v646 = vmul.f32 %v623, %v640
        %v647 = vmul.f32 %v624, %v640
        %v648 = vmul.f32 %v625, %v640
        %v649 = vmul.f32 %v626, %v640
        %v650 = vmul.f32 %v627, %v640
        %v651 = vmul.f32 %v628, %v640
        %v652 = vmul.f32 %v629, %v640
        %v653 = vmul.f32 %v630, %v640
        %v654 = vmul.f32 %v631, %v640
        %v655 = vmul.f32 %v632, %v640
        %v656 = vmul.f32 %v633, %v640
        %v657 = vmul.f32 %v634, %v640
        %v658 = vld [vmem:[#allocation6] sm:$0x1]
        %v660 = vlaneseq
        %v661 = vshrl.u32 %v660, 7
        %v662 = vsub.s32 0, %v661
        %v663 = vrot.slane %v658, %v662
        %v665 = vadd.f32 %v642, %v663
        %v666 = vadd.f32 %v643, %v663
        %v667 = vadd.f32 %v644, %v663
        %v668 = vadd.f32 %v645, %v663
        %v669 = vadd.f32 %v646, %v663
        %v670 = vadd.f32 %v647, %v663
        %v671 = vadd.f32 %v648, %v663
        %v672 = vadd.f32 %v649, %v663
        %v673 = vadd.f32 %v650, %v663
        %v674 = vadd.f32 %v651, %v663
        %v675 = vadd.f32 %v652, %v663
        %v676 = vadd.f32 %v653, %v663
        %v677 = vadd.f32 %v654, %v663
        %v678 = vadd.f32 %v655, %v663
        %v679 = vadd.f32 %v656, %v663
        %v680 = vadd.f32 %v657, %v663
        %vm681 = vcmask 64512
        %682 = vst.msk [vmem:[%s229] sm:$0xff] %vm681, %v665
        %683 = vst.msk [vmem:[%s229 + $0x8] sm:$0xff] %vm681, %v666
        %684 = vst.msk [vmem:[%s229 + $0x10] sm:$0xff] %vm681, %v667
        %685 = vst.msk [vmem:[%s229 + $0x18] sm:$0xff] %vm681, %v668
        %686 = vst.msk [vmem:[%s229 + $0x20] sm:$0xff] %vm681, %v669
        %687 = vst.msk [vmem:[%s229 + $0x28] sm:$0xff] %vm681, %v670
        %688 = vst.msk [vmem:[%s229 + $0x30] sm:$0xff] %vm681, %v671
        %689 = vst.msk [vmem:[%s229 + $0x38] sm:$0xff] %vm681, %v672
        %690 = vst.msk [vmem:[%s229 + $0x40] sm:$0xff] %vm681, %v673
        %691 = vst.msk [vmem:[%s229 + $0x48] sm:$0xff] %vm681, %v674
        %692 = vst.msk [vmem:[%s229 + $0x50] sm:$0xff] %vm681, %v675
        %693 = vst.msk [vmem:[%s229 + $0x58] sm:$0xff] %vm681, %v676
        %694 = vst.msk [vmem:[%s229 + $0x60] sm:$0xff] %vm681, %v677
        %695 = vst.msk [vmem:[%s229 + $0x68] sm:$0xff] %vm681, %v678
        %696 = vst.msk [vmem:[%s229 + $0x70] sm:$0xff] %vm681, %v679
        %697 = vst.msk [vmem:[%s229 + $0x78] sm:$0xff] %vm681, %v680
      $region52: #{factorized_reduce.1} parent=35 // pred_fallthru
        _
      %s698 = smul.u32 %s20, %s19
      %s699 = smul.u32 16, %s698
      %p700 = scmp.lt.s32.totalorder %s699, 15
      %s701 = scalar_select %p700, %s699, 15
      %s702 = smul.addr %s701, 8
      %s703 = scalar_lea.vmem %s4, %s702
      // Predicated region
      $region53: #{factorized_reduce.1} parent=35 // pred_check
        %p704 = pneg %p140
      $region54: #{factorized_reduce.1} parent=35 // pred_check_branch
        %706 = sbr.rel (%p704) target = $region56
      $region55: #{factorized_reduce.1} parent=35 // pred_region
        %s707 = smul.u32 %s20, %s19
        %s708 = smul.u32 16, %s707
      $region56: #{factorized_reduce.1} parent=35 // pred_fallthru
        _
    $region36: #{factorized_reduce.1} parent=5 // pred_fallthru
      _
    %p709 = scmp.le.s32.totalorder 2, %s10
    // Predicated region
    $region57: #{factorized_reduce.1} parent=5 // pred_check
      %p710 = pneg %p709
    $region58: #{factorized_reduce.1} parent=5 // pred_check_branch
      %712 = sbr.rel (%p710) target = $region60
    $region59: #{factorized_reduce.1} parent=5 // pred_region
      %s713 = ssub.s32 %s10, 2
      // Predicated region
      $region61: #{factorized_reduce.1} parent=59 // pred_check
        %p714 = pneg %p146
      $region62: #{factorized_reduce.1} parent=59 // pred_check_branch
        %716 = sbr.rel (%p714) target = $region64
      $region63: #{factorized_reduce.1} parent=59 // pred_region
        %s717 = smul.u32 %s22, %s21
        %s718 = smul.u32 16, %s717
        %p719 = scmp.lt.s32.totalorder %s718, 15
        %s720 = scalar_select %p719, %s718, 15
        %s721 = smul.addr %s720, 8
        %s722 = scalar_lea.vmem %s4, %s721
      $region64: #{factorized_reduce.1} parent=59 // pred_fallthru
        _
    $region60: #{factorized_reduce.1} parent=5 // pred_fallthru
      _
  $region6: #{factorized_reduce.1} parent=0 // loop_footer
    %s14 = sadd.s32 1, %s10
  $region7: #{factorized_reduce.1} parent=0 // loop_footer_branch
    %9 = sbr.rel target = $region3
  $region8: #{factorized_reduce.1} parent=0 // loop_exit
    _

</llo_original>
